<compile_context>
chip_gen: v7x
topology: tpu7x:2x2x1
jax: 0.10.0
libtpu: 0.0.40
codegen_flags: <defaults>
</compile_context>

<pallas_src>
import math
import functools

import jax
import jax.numpy as jnp
from jax import lax
from jax.experimental import pallas as pl
from jax.experimental.pallas import tpu as pltpu


def _round_up(x, m):
    return ((x + m - 1) // m) * m


def _default_hidden_dtype():
    """bf16 hidden-layer math on chips with bf16 VPU/EUP (v6e+); f32 on v5e/older."""
    try:
        kind = jax.devices()[0].device_kind.lower()
    except Exception:  # pragma: no cover - no device available
        return jnp.float32
    if any(tag in kind for tag in ('v2', 'v3', 'v4', 'v5')):
        return jnp.float32
    return jnp.bfloat16


# --------------------------------------------------------------------------
# Kernel
# --------------------------------------------------------------------------
def _gmm_mlp_kernel(K, KA, min_log_std, max_log_std, std_parameterization,
                    # inputs
                    x_ref,
                    w1_ref, b1_ref, w2_ref, b2_ref, w3_ref, b3_ref,
                    # output
                    out_ref):
    hd = b1_ref.dtype                       # hidden compute dtype (f32 on v5e, bf16 on v6e/v7x)
    x = x_ref[...].astype(w1_ref.dtype)     # in-kernel f32 -> bf16 cast (free under this roofline)

    # Fused layer 1: both trunks share one matmul + one tanh slab.
    h = jnp.dot(x, w1_ref[...], preferred_element_type=jnp.float32).astype(hd)
    h = jnp.tanh(h + b1_ref[...])
    # Fused layer 2: block-diagonal weight keeps the two trunks independent.
    h = jnp.dot(h.astype(w2_ref.dtype), w2_ref[...],
                preferred_element_type=jnp.float32).astype(hd)
    h = jnp.tanh(h + b2_ref[...])
    # Fused heads: one lane-dense slab  y = [mix(K) | mean(K*A) | log_std(K*A) | 0-pad].
    # Head math, clamp and exp stay in f32 on every chip.
    y = (jnp.dot(h.astype(w3_ref.dtype), w3_ref[...],
                 preferred_element_type=jnp.float32) + b3_ref[...])

    # log_std post-processing on the full slab, merged back with a broadcast
    # column mask -> no narrow slices and no masked partial stores.
    log_std = y
    if min_log_std is not None:
        log_std = jnp.maximum(log_std, min_log_std)
    if max_log_std is not None:
        log_std = jnp.minimum(log_std, max_log_std)

    if std_parameterization == 'exp':
        std = jnp.exp(log_std)
    else:
        # torch: log(exp(exp(log_std)) + 1); stable form (z = exp(log_std) > 0):
        #   softplus(z) = z + log1p(exp(-z))
        z = jnp.exp(log_std)
        std = z + jnp.log1p(jnp.exp(-z))

    # (1, n_out_pad) column mask, broadcast by jnp.where (no full-tile iota vregs).
    col = lax.broadcasted_iota(jnp.int32, (1, y.shape[1]), 1)
    is_std = (col >= K + KA) & (col < K + 2 * KA)
    out_ref[...] = jnp.where(is_std, std, y).astype(out_ref.dtype)


# --------------------------------------------------------------------------
# One-time parameter packing (call once per parameter update, NOT per forward)
# --------------------------------------------------------------------------
def pack_params(params, *, num_components, action_dim,
                param_dtype=jnp.bfloat16, hidden_dtype=None):
    """Fuse the two trunks and three heads into 3 wide, lane-dense weights.

    NOTE: param_dtype=bf16 deviates slightly (~1e-2 rel) from the f32 torch
    reference; pass param_dtype=jnp.float32 (and out_dtype=jnp.float32 in the
    forward) for parity tests.
    """
    if hidden_dtype is None:
        hidden_dtype = _default_hidden_dtype()
    K, A = num_components, action_dim
    KA = K * A
    n_out = K + 2 * KA
    n_out_pad = _round_up(n_out, 128)       # lane-dense output slab

    H1 = params['w1'].shape[1]
    SH1 = params['sw1'].shape[1]
    H2 = params['w2'].shape[1]
    SH2 = params['sw2'].shape[1]

    # layer 1: [w1 | sw1]
    w1f = jnp.concatenate([params['w1'], params['sw1']], axis=1)
    b1f = jnp.concatenate([params['b1'], params['sb1']], axis=1)

    # layer 2: block-diagonal(w2, sw2)
    w2f = jnp.zeros((H1 + SH1, H2 + SH2), jnp.float32)
    w2f = w2f.at[:H1, :H2].set(params['w2'])
    w2f = w2f.at[H1:, H2:].set(params['sw2'])
    b2f = jnp.concatenate([params['b2'], params['sb2']], axis=1)

    # heads: [mix | mean | log_std | zero-pad to a multiple of 128 lanes]
    w3f = jnp.zeros((H2 + SH2, n_out_pad), jnp.float32)
    w3f = w3f.at[:H2, :K].set(params['wmix'])
    w3f = w3f.at[:H2, K:K + KA].set(params['wmean'])
    w3f = w3f.at[H2:, K + KA:K + 2 * KA].set(params['wstd'])
    b3f = jnp.zeros((1, n_out_pad), jnp.float32)
    b3f = b3f.at[:, :K].set(params['bmix'])
    b3f = b3f.at[:, K:K + KA].set(params['bmean'])
    # fold the learned log(init_std) scalar into the log_std head bias.
    b3f = b3f.at[:, K + KA:K + 2 * KA].set(params['bstd'] + params['init_std'][0, 0])

    return (w1f.astype(param_dtype), b1f.astype(hidden_dtype),
            w2f.astype(param_dtype), b2f.astype(hidden_dtype),
            w3f.astype(param_dtype), b3f)


# --------------------------------------------------------------------------
# Forward
# --------------------------------------------------------------------------
_STATIC_ARGS = ('num_components', 'action_dim', 'min_std', 'max_std',
                'std_parameterization', 'tile_rows', 'out_dtype')


def _forward_impl(x, packed, *, num_components, action_dim,
                  min_std=1e-6, max_std=None, std_parameterization='exp',
                  tile_rows=4096, out_dtype=jnp.bfloat16):
    if std_parameterization not in ('exp', 'softplus'):
        raise NotImplementedError
    w1f, b1f, w2f, b2f, w3f, b3f = packed
    B, D = x.shape
    K, A = num_components, action_dim
    KA = K * A
    n_out_pad = w3f.shape[1]
    assert n_out_pad >= K + 2 * KA

    min_log_std = None if min_std is None else math.log(min_std)
    max_log_std = None if max_std is None else math.log(max_std)

    # Batch tiling: tb is a multiple of 8 (or equals B when B <= tile_rows);
    # pl.cdiv grid lets Pallas handle the ragged last block -> no x pad pass
    # and no wasted padded-output writes.
    tile_rows = max(8, (int(tile_rows) // 8) * 8)
    tb = B if B <= tile_rows else tile_rows
    grid = (pl.cdiv(B, tb),)

    kernel = functools.partial(_gmm_mlp_kernel, K, KA,
                               min_log_std, max_log_std, std_parameterization)

    def resident(a):  # full-array block, constant index_map -> stays in VMEM
        nd = a.ndim
        return pl.BlockSpec(a.shape, lambda i, _nd=nd: (0,) * _nd)

    return pl.pallas_call(
        kernel,
        out_shape=jax.ShapeDtypeStruct((B, n_out_pad), out_dtype),
        grid=grid,
        in_specs=[pl.BlockSpec((tb, D), lambda i: (i, 0)),
                  resident(w1f), resident(b1f),
                  resident(w2f), resident(b2f),
                  resident(w3f), resident(b3f)],
        out_specs=pl.BlockSpec((tb, n_out_pad), lambda i: (i, 0)),
        compiler_params=pltpu.CompilerParams(
            dimension_semantics=("parallel",),
            vmem_limit_bytes=32 * 1024 * 1024),
    )(x, w1f, b1f, w2f, b2f, w3f, b3f)


# Packed variant: returns the lane-dense (B, n_out_pad) slab directly so
# consumers can avoid a post-kernel re-read of the output stream.
gmm_mlp_forward_packed = jax.jit(_forward_impl, static_argnames=_STATIC_ARGS)


def split_gmm_outputs(out, *, num_components, action_dim):
    """Split the packed slab into (mix[B,K], mean[B,K,A], std[B,K,A])."""
    K, A = num_components, action_dim
    KA = K * A
    B = out.shape[0]
    mix = out[:, :K]
    mean = out[:, K:K + KA].reshape(B, K, A)
    std = out[:, K + KA:K + 2 * KA].reshape(B, K, A)
    return mix, mean, std


@functools.partial(jax.jit, static_argnames=_STATIC_ARGS)
def gmm_mlp_forward(x, packed, *, num_components, action_dim,
                    min_std=1e-6, max_std=None, std_parameterization='exp',
                    tile_rows=4096, out_dtype=jnp.bfloat16):
    """Convenience wrapper: packed forward + split (jit with your consumer to fuse)."""
    out = _forward_impl(x, packed, num_components=num_components,
                        action_dim=action_dim, min_std=min_std, max_std=max_std,
                        std_parameterization=std_parameterization,
                        tile_rows=tile_rows, out_dtype=out_dtype)
    return split_gmm_outputs(out, num_components=num_components, action_dim=action_dim)


# --------------------------------------------------------------------------
# Parameter init (mirrors torch xavier_uniform_ / zeros_ defaults)
# --------------------------------------------------------------------------
def _xavier_uniform(key, fan_in, fan_out):
    limit = math.sqrt(6.0 / (fan_in + fan_out))
    return jax.random.uniform(key, (fan_in, fan_out), jnp.float32, -limit, limit)


def init_params(key, input_dim, action_dim, num_components,
                hidden_sizes=(32, 32), std_hidden_sizes=(32, 32), init_std=1.0):
    h1, h2 = hidden_sizes
    sh1, sh2 = std_hidden_sizes
    K, A = num_components, action_dim
    keys = jax.random.split(key, 7)
    return {
        # mean / mix trunk
        'w1': _xavier_uniform(keys[0], input_dim, h1),
        'b1': jnp.zeros((1, h1), jnp.float32),
        'w2': _xavier_uniform(keys[1], h1, h2),
        'b2': jnp.zeros((1, h2), jnp.float32),
        'wmix': _xavier_uniform(keys[2], h2, K),
        'bmix': jnp.zeros((1, K), jnp.float32),
        'wmean': _xavier_uniform(keys[3], h2, K * A),
        'bmean': jnp.zeros((1, K * A), jnp.float32),
        # std trunk
        'sw1': _xavier_uniform(keys[4], input_dim, sh1),
        'sb1': jnp.zeros((1, sh1), jnp.float32),
        'sw2': _xavier_uniform(keys[5], sh1, sh2),
        'sb2': jnp.zeros((1, sh2), jnp.float32),
        'wstd': _xavier_uniform(keys[6], sh2, K * A),
        'bstd': jnp.zeros((1, K * A), jnp.float32),
        # learned scalar init_std parameter (stored as log(init_std), as in torch)
        'init_std': jnp.full((1, 1), math.log(init_std), jnp.float32),
    }


if __name__ == "__main__":
    # TODO(synk): the TanhGMM distribution wrapper (sampling / log_prob) has no
    # Pallas equivalent; we emit its parameters (mix logits, means, stds).
    key = jax.random.PRNGKey(0)
    input_dim = 16
    action_dim = 8
    num_components = 4
    batch = 8

    kp, kx = jax.random.split(key)
    params = init_params(kp, input_dim, action_dim, num_components)
    # Repack once (per parameter update), outside the per-call forward path.
    packed = pack_params(params, num_components=num_components, action_dim=action_dim)
    x = jax.random.normal(kx, (batch, input_dim), jnp.float32)

    # 'exp' parameterization (module default)
    mix, mean, std = gmm_mlp_forward(
        x, packed,
        num_components=num_components, action_dim=action_dim,
        min_std=1e-6, max_std=None, std_parameterization='exp')
    jax.block_until_ready((mix, mean, std))

    assert mix.shape == (batch, num_components)
    assert mean.shape == (batch, num_components, action_dim)
    assert std.shape == (batch, num_components, action_dim)
    assert bool(jnp.all(jnp.isfinite(mix)))
    assert bool(jnp.all(jnp.isfinite(mean)))
    assert bool(jnp.all(std > 0))

    # 'softplus' parameterization (stable form) sanity check
    _, _, std_sp = gmm_mlp_forward(
        x, packed,
        num_components=num_components, action_dim=action_dim,
        min_std=1e-6, max_std=None, std_parameterization='softplus')
    jax.block_until_ready(std_sp)
    assert bool(jnp.all(jnp.isfinite(std_sp))) and bool(jnp.all(std_sp > 0))

    # Packed-slab path (no post-kernel slice re-read) sanity check
    slab = gmm_mlp_forward_packed(
        x, packed,
        num_components=num_components, action_dim=action_dim,
        min_std=1e-6, max_std=None, std_parameterization='exp')
    jax.block_until_ready(slab)
    assert slab.shape[0] == batch and slab.shape[1] % 128 == 0

    print("KERNEL_OK")
</pallas_src>

<mosaic_0001>
module attributes {stable_mosaic.version = 11 : i64} {
  func.func @_gmm_mlp_kernel(%arg0: i32, %arg1: memref<8x16xf32, #tpu.memory_space<vmem>>, %arg2: memref<16x64xbf16, #tpu.memory_space<vmem>>, %arg3: memref<1x64xbf16, #tpu.memory_space<vmem>>, %arg4: memref<64x64xbf16, #tpu.memory_space<vmem>>, %arg5: memref<1x64xbf16, #tpu.memory_space<vmem>>, %arg6: memref<64x128xbf16, #tpu.memory_space<vmem>>, %arg7: memref<1x128xf32, #tpu.memory_space<vmem>>, %arg8: memref<8x128xbf16, #tpu.memory_space<vmem>>) attributes {dimension_semantics = [#tpu.dimension_semantics<parallel>], iteration_bounds = array<i64: 1>, scalar_prefetch = 0 : i64, scratch_operands = 0 : i64, tpu.core_type = #tpu.core_type<tc>, window_params = [{transform_indices = @transform_0, window_bounds = array<i64: 8, 16>}, {pipeline_mode = #tpu.pipeline_mode<synchronous>, transform_indices = @transform_1, window_bounds = array<i64: 16, 64>}, {pipeline_mode = #tpu.pipeline_mode<synchronous>, transform_indices = @transform_2, window_bounds = array<i64: 1, 64>}, {pipeline_mode = #tpu.pipeline_mode<synchronous>, transform_indices = @transform_3, window_bounds = array<i64: 64, 64>}, {pipeline_mode = #tpu.pipeline_mode<synchronous>, transform_indices = @transform_4, window_bounds = array<i64: 1, 64>}, {pipeline_mode = #tpu.pipeline_mode<synchronous>, transform_indices = @transform_5, window_bounds = array<i64: 64, 128>}, {pipeline_mode = #tpu.pipeline_mode<synchronous>, transform_indices = @transform_6, window_bounds = array<i64: 1, 128>}, {transform_indices = @transform_7, window_bounds = array<i64: 8, 128>}]} {
    %c0 = arith.constant 0 : index
    %c0_0 = arith.constant 0 : index
    %0 = vector.load %arg1[%c0, %c0_0] : memref<8x16xf32, #tpu.memory_space<vmem>>, vector<8x16xf32>
    %1 = arith.truncf %0 : vector<8x16xf32> to vector<8x16xbf16>
    %c0_1 = arith.constant 0 : index
    %c0_2 = arith.constant 0 : index
    %2 = vector.load %arg2[%c0_1, %c0_2] : memref<16x64xbf16, #tpu.memory_space<vmem>>, vector<16x64xbf16>
    %cst = arith.constant dense<0.000000e+00> : vector<8x64xf32>
    %3 = tpu.matmul %1, %2, %cst {dimension_numbers = #tpu.dot_dimension_numbers<[1], [0], [0], [1], [0, 0, 1, 1], [], []>} : vector<8x16xbf16>, vector<16x64xbf16>, vector<8x64xf32> -> vector<8x64xf32>
    %4 = arith.truncf %3 : vector<8x64xf32> to vector<8x64xbf16>
    %c0_3 = arith.constant 0 : index
    %c0_4 = arith.constant 0 : index
    %5 = vector.load %arg3[%c0_3, %c0_4] : memref<1x64xbf16, #tpu.memory_space<vmem>>, vector<1x64xbf16>
    %6 = vector.broadcast %5 : vector<1x64xbf16> to vector<8x64xbf16>
    %7 = arith.addf %4, %6 : vector<8x64xbf16>
    %8 = math.tanh %7 : vector<8x64xbf16>
    %c0_5 = arith.constant 0 : index
    %c0_6 = arith.constant 0 : index
    %9 = vector.load %arg4[%c0_5, %c0_6] : memref<64x64xbf16, #tpu.memory_space<vmem>>, vector<64x64xbf16>
    %cst_7 = arith.constant dense<0.000000e+00> : vector<8x64xf32>
    %10 = tpu.matmul %8, %9, %cst_7 {dimension_numbers = #tpu.dot_dimension_numbers<[1], [0], [0], [1], [0, 0, 1, 1], [], []>} : vector<8x64xbf16>, vector<64x64xbf16>, vector<8x64xf32> -> vector<8x64xf32>
    %11 = arith.truncf %10 : vector<8x64xf32> to vector<8x64xbf16>
    %c0_8 = arith.constant 0 : index
    %c0_9 = arith.constant 0 : index
    %12 = vector.load %arg5[%c0_8, %c0_9] : memref<1x64xbf16, #tpu.memory_space<vmem>>, vector<1x64xbf16>
    %13 = vector.broadcast %12 : vector<1x64xbf16> to vector<8x64xbf16>
    %14 = arith.addf %11, %13 : vector<8x64xbf16>
    %15 = math.tanh %14 : vector<8x64xbf16>
    %c0_10 = arith.constant 0 : index
    %c0_11 = arith.constant 0 : index
    %16 = vector.load %arg6[%c0_10, %c0_11] : memref<64x128xbf16, #tpu.memory_space<vmem>>, vector<64x128xbf16>
    %cst_12 = arith.constant dense<0.000000e+00> : vector<8x128xf32>
    %17 = tpu.matmul %15, %16, %cst_12 {dimension_numbers = #tpu.dot_dimension_numbers<[1], [0], [0], [1], [0, 0, 1, 1], [], []>} : vector<8x64xbf16>, vector<64x128xbf16>, vector<8x128xf32> -> vector<8x128xf32>
    %c0_13 = arith.constant 0 : index
    %c0_14 = arith.constant 0 : index
    %18 = vector.load %arg7[%c0_13, %c0_14] : memref<1x128xf32, #tpu.memory_space<vmem>>, vector<1x128xf32>
    %19 = vector.broadcast %18 : vector<1x128xf32> to vector<8x128xf32>
    %20 = arith.addf %17, %19 : vector<8x128xf32>
    %cst_15 = arith.constant -13.8155107 : f32
    %21 = vector.broadcast %cst_15 : f32 to vector<8x128xf32>
    %22 = arith.maximumf %20, %21 : vector<8x128xf32>
    %23 = math.exp %22 : vector<8x128xf32>
    %24 = tpu.iota {dimensions = array<i32: 1>} : vector<1x128xi32>
    %c36_i32 = arith.constant 36 : i32
    %25 = vector.broadcast %c36_i32 : i32 to vector<1x128xi32>
    %26 = arith.cmpi sge, %24, %25 : vector<1x128xi32>
    %c68_i32 = arith.constant 68 : i32
    %27 = vector.broadcast %c68_i32 : i32 to vector<1x128xi32>
    %28 = arith.cmpi slt, %24, %27 : vector<1x128xi32>
    %29 = arith.andi %26, %28 : vector<1x128xi1>
    %30 = vector.shape_cast %29 : vector<1x128xi1> to vector<1x128xi1>
    %31 = vector.broadcast %30 : vector<1x128xi1> to vector<8x128xi1>
    %32 = arith.select %31, %23, %20 : vector<8x128xi1>, vector<8x128xf32>
    %33 = arith.truncf %32 : vector<8x128xf32> to vector<8x128xbf16>
    %c0_16 = arith.constant 0 : index
    %c0_17 = arith.constant 0 : index
    %34 = vector.load %arg8[%c0_16, %c0_17] : memref<8x128xbf16, #tpu.memory_space<vmem>>, vector<8x128xbf16>
    tpu.vector_store %arg8[%c0_16, %c0_17], %33 {strides = array<i32>} : memref<8x128xbf16, #tpu.memory_space<vmem>>, vector<8x128xbf16>,
    return
  }
  func.func @transform_0(%arg0: i32) -> (i32, i32) {
    %c0_i32 = arith.constant 0 : i32
    %c0_i32_0 = arith.constant 0 : i32
    return %arg0, %c0_i32 : i32, i32
  }
  func.func @transform_1(%arg0: i32) -> (i32, i32) {
    %c0_i32 = arith.constant 0 : i32
    %c0_i32_0 = arith.constant 0 : i32
    %c0_i32_1 = arith.constant 0 : i32
    return %c0_i32, %c0_i32_0 : i32, i32
  }
  func.func @transform_2(%arg0: i32) -> (i32, i32) {
    %c0_i32 = arith.constant 0 : i32
    %c0_i32_0 = arith.constant 0 : i32
    %c0_i32_1 = arith.constant 0 : i32
    return %c0_i32, %c0_i32_0 : i32, i32
  }
  func.func @transform_3(%arg0: i32) -> (i32, i32) {
    %c0_i32 = arith.constant 0 : i32
    %c0_i32_0 = arith.constant 0 : i32
    %c0_i32_1 = arith.constant 0 : i32
    return %c0_i32, %c0_i32_0 : i32, i32
  }
  func.func @transform_4(%arg0: i32) -> (i32, i32) {
    %c0_i32 = arith.constant 0 : i32
    %c0_i32_0 = arith.constant 0 : i32
    %c0_i32_1 = arith.constant 0 : i32
    return %c0_i32, %c0_i32_0 : i32, i32
  }
  func.func @transform_5(%arg0: i32) -> (i32, i32) {
    %c0_i32 = arith.constant 0 : i32
    %c0_i32_0 = arith.constant 0 : i32
    %c0_i32_1 = arith.constant 0 : i32
    return %c0_i32, %c0_i32_0 : i32, i32
  }
  func.func @transform_6(%arg0: i32) -> (i32, i32) {
    %c0_i32 = arith.constant 0 : i32
    %c0_i32_0 = arith.constant 0 : i32
    %c0_i32_1 = arith.constant 0 : i32
    return %c0_i32, %c0_i32_0 : i32, i32
  }
  func.func @transform_7(%arg0: i32) -> (i32, i32) {
    %c0_i32 = arith.constant 0 : i32
    %c0_i32_0 = arith.constant 0 : i32
    return %arg0, %c0_i32 : i32, i32
  }
}

</mosaic_0001>

<llo_original>
// kernel: gmm_mlp_forward.1
$region0: #{gmm_mlp_forward.1}
  #allocation0 [shape = 'u32[]', space=smem, size = 0x4, offset = 0x4, fixed_abs, tag = 'smem constant byte address 0x4 - core index']
  #allocation1 [shape = 'u32[144,128]{1,0:T(1,128)}', space=vmem, size = 0x12000, scoped, tag = 'internal scratch']
  %s0 = inlined_call_operand.hbm [shape: f32[8,16], index: 0, kind: input, shape index: {}]
  %s1 = inlined_call_operand.hbm [shape: bf16[16,64], index: 1, kind: input, shape index: {}]
  %s2 = inlined_call_operand.vmem [shape: bf16[1,64], index: 2, kind: input, shape index: {}]
  %s3 = inlined_call_operand.hbm [shape: bf16[64,64], index: 3, kind: input, shape index: {}]
  %s4 = inlined_call_operand.vmem [shape: bf16[1,64], index: 4, kind: input, shape index: {}]
  %s5 = inlined_call_operand.hbm [shape: bf16[64,128], index: 5, kind: input, shape index: {}]
  %s6 = inlined_call_operand.vmem [shape: f32[1,128], index: 6, kind: input, shape index: {}]
  %s7 = inlined_call_operand.vmem [shape: bf16[8,128], index: 7, kind: output, shape index: {}]
  %s8 = sld [smem:[#allocation0]]
  $region54: #{gmm_mlp_forward.1} parent=0
    _
  %s10 = ssub.s32 1, %s8
  %s11 = scalar_select 0, %s10, %s8
  $region1: #{gmm_mlp_forward.1} parent=0
    #allocation2 [shape = 'u8[4096]{0}', space=vmem, size = 0x1000, scoped, tag = 'input window, operand 0, single buffered']
    #allocation3 [shape = 's32[1]{0}', space=sflag, size = 0x4, scoped, tag = 'scoped memory for gmm_mlp_forward.1']
    #allocation4 [shape = 'u8[4096]{0}', space=vmem, size = 0x1000, scoped, tag = 'input window, operand 1, single buffered']
    #allocation5 [shape = 's32[1]{0}', space=sflag, size = 0x4, scoped, tag = 'scoped memory for gmm_mlp_forward.1']
    #allocation6 [shape = 'u8[16384]{0}', space=vmem, size = 0x4000, scoped, tag = 'input window, operand 3, single buffered']
    #allocation7 [shape = 'u8[16384]{0}', space=vmem, size = 0x4000, scoped, tag = 'input window, operand 5, single buffered']
    #allocation8 [shape = 's32[1]{0}', space=sflag, size = 0x4, scoped, tag = 'scoped memory for gmm_mlp_forward.1']
    %12 = vsyncpa [#allocation3], 0
    %13 = vsyncpa [#allocation5], 0
    %14 = vsyncpa [#allocation8], 0
    // Predicated region
    $region2: #{gmm_mlp_forward.1} parent=1 // pred_check
      _
    $region3: #{gmm_mlp_forward.1} parent=1 // pred_check_branch
      %16 = sbr.rel (0) target = $region5
    $region4: #{gmm_mlp_forward.1} parent=1 // pred_region
      %s18 = ssub.s32 128, 128
      %19 = vsyncadd [#allocation3], %s18
      %s21 = sshll.u32 [#allocation2], 4
      %s22 = int_to_ptr.vmem [resolvable:$true] %s21
      %24 = dma.hbm_to_vmem [thread:$0]  %s0, 128, %s22, [#allocation3]
    $region5: #{gmm_mlp_forward.1} parent=1 // pred_fallthru
      _
    // Predicated region
    $region6: #{gmm_mlp_forward.1} parent=1 // pred_check
      _
    $region7: #{gmm_mlp_forward.1} parent=1 // pred_check_branch
      %26 = sbr.rel (0) target = $region9
    $region8: #{gmm_mlp_forward.1} parent=1 // pred_region
      %s28 = ssub.s32 128, 128
      %29 = vsyncadd [#allocation5], %s28
      %s30 = sshll.u32 [#allocation4], 4
      %s31 = int_to_ptr.vmem [resolvable:$true] %s30
      %36 = dma.hbm_to_vmem [thread:$0]  %s1, 128, %s31, [#allocation5], 64, 64, 4
    $region9: #{gmm_mlp_forward.1} parent=1 // pred_fallthru
      _
    // Predicated region
    $region10: #{gmm_mlp_forward.1} parent=1 // pred_check
      _
    $region11: #{gmm_mlp_forward.1} parent=1 // pred_check_branch
      %38 = sbr.rel (0) target = $region13
    $region12: #{gmm_mlp_forward.1} parent=1 // pred_region
      _
    $region13: #{gmm_mlp_forward.1} parent=1 // pred_fallthru
      _
    // Predicated region
    $region14: #{gmm_mlp_forward.1} parent=1 // pred_check
      _
    $region15: #{gmm_mlp_forward.1} parent=1 // pred_check_branch
      %40 = sbr.rel (0) target = $region17
    $region16: #{gmm_mlp_forward.1} parent=1 // pred_region
      %s42 = ssub.s32 512, 512
      %43 = vsyncadd [#allocation5], %s42
      %s44 = sshll.u32 [#allocation6], 4
      %s45 = int_to_ptr.vmem [resolvable:$true] %s44
      %50 = dma.hbm_to_vmem [thread:$0]  %s3, 512, %s45, [#allocation5], 64, 64, 4
    $region17: #{gmm_mlp_forward.1} parent=1 // pred_fallthru
      _
    // Predicated region
    $region18: #{gmm_mlp_forward.1} parent=1 // pred_check
      _
    $region19: #{gmm_mlp_forward.1} parent=1 // pred_check_branch
      %52 = sbr.rel (0) target = $region21
    $region20: #{gmm_mlp_forward.1} parent=1 // pred_region
      _
    $region21: #{gmm_mlp_forward.1} parent=1 // pred_fallthru
      _
    // Predicated region
    $region22: #{gmm_mlp_forward.1} parent=1 // pred_check
      _
    $region23: #{gmm_mlp_forward.1} parent=1 // pred_check_branch
      %54 = sbr.rel (0) target = $region25
    $region24: #{gmm_mlp_forward.1} parent=1 // pred_region
      %s56 = ssub.s32 512, 512
      %57 = vsyncadd [#allocation8], %s56
      %s58 = sshll.u32 [#allocation7], 4
      %s59 = int_to_ptr.vmem [resolvable:$true] %s58
      %64 = dma.hbm_to_vmem [thread:$0]  %s5, 512, %s59, [#allocation8], 64, 64, 4
    $region25: #{gmm_mlp_forward.1} parent=1 // pred_fallthru
      _
    // Predicated region
    $region26: #{gmm_mlp_forward.1} parent=1 // pred_check
      _
    $region27: #{gmm_mlp_forward.1} parent=1 // pred_check_branch
      %66 = sbr.rel (0) target = $region29
    $region28: #{gmm_mlp_forward.1} parent=1 // pred_region
      _
    $region29: #{gmm_mlp_forward.1} parent=1 // pred_fallthru
      _
    // Predicated region
    $region30: #{gmm_mlp_forward.1} parent=1 // pred_check
      _
    $region31: #{gmm_mlp_forward.1} parent=1 // pred_check_branch
      %68 = sbr.rel (0) target = $region33
    $region32: #{gmm_mlp_forward.1} parent=1 // pred_region
      %69 = dma.done [#allocation3], 128
    $region33: #{gmm_mlp_forward.1} parent=1 // pred_fallthru
      _
    // Predicated region
    $region34: #{gmm_mlp_forward.1} parent=1 // pred_check
      _
    $region35: #{gmm_mlp_forward.1} parent=1 // pred_check_branch
      %71 = sbr.rel (0) target = $region37
    $region36: #{gmm_mlp_forward.1} parent=1 // pred_region
      %72 = dma.done [#allocation5], 128
    $region37: #{gmm_mlp_forward.1} parent=1 // pred_fallthru
      _
    // Predicated region
    $region38: #{gmm_mlp_forward.1} parent=1 // pred_check
      _
    $region39: #{gmm_mlp_forward.1} parent=1 // pred_check_branch
      %74 = sbr.rel (0) target = $region41
    $region40: #{gmm_mlp_forward.1} parent=1 // pred_region
      %75 = dma.done [#allocation5], 512
    $region41: #{gmm_mlp_forward.1} parent=1 // pred_fallthru
      _
    // Predicated region
    $region42: #{gmm_mlp_forward.1} parent=1 // pred_check
      _
    $region43: #{gmm_mlp_forward.1} parent=1 // pred_check_branch
      %77 = sbr.rel (0) target = $region45
    $region44: #{gmm_mlp_forward.1} parent=1 // pred_region
      %78 = dma.done [#allocation8], 512
    $region45: #{gmm_mlp_forward.1} parent=1 // pred_fallthru
      _
    %v80 = vld [vmem:[#allocation2] sm:$0xff]
    %v81 = vpack.c.bf16 %v80, %v80
    %v82 = vld [vmem:[#allocation4] sm:$0xf]
    %v83 = vld [vmem:[#allocation4 + $0x4] sm:$0xf]
    %v86 = vunpack.c.l.b16 %v82
    %v87 = vunpack.c.l.b16 %v83
    %v88 = vpack.c.b16 %v87, %v86
    %vm90 = vcmask 130048
    %v92 = vsel %vm90, %v81, 0
    %94 = vmatprep.subr.bf16.mxu0 0
    %95 = vmatpush1.bf16.msra.mxu0 %v88
    %96 = vmatprep.subr.bf16.mxu0 0
    %97 = vmatpush1.bf16.msra.mxu0 0
    %98 = vmatprep.subr.bf16.mxu0 0
    %99 = vmatpush1.bf16.msra.mxu0 0
    %100 = vmatprep.subr.bf16.mxu0 0
    %101 = vmatpush1.bf16.msra.mxu0 0
    %102 = vmatprep.subr.bf16.mxu0 0
    %103 = vmatpush1.bf16.msra.mxu0 0
    %104 = vmatprep.subr.bf16.mxu0 0
    %105 = vmatpush1.bf16.msra.mxu0 0
    %106 = vmatprep.subr.bf16.mxu0 0
    %107 = vmatpush1.bf16.msra.mxu0 0
    %108 = vmatprep.subr.bf16.mxu0 0
    %109 = vmatpush1.bf16.msra.mxu0 0
    %110 = vmatprep.subr.bf16.mxu0 0
    %111 = vmatpush1.bf16.msra.mxu0 0
    %112 = vmatprep.subr.bf16.mxu0 0
    %113 = vmatpush1.bf16.msra.mxu0 0
    %114 = vmatprep.subr.bf16.mxu0 0
    %115 = vmatpush1.bf16.msra.mxu0 0
    %116 = vmatprep.subr.bf16.mxu0 0
    %117 = vmatpush1.bf16.msra.mxu0 0
    %118 = vmatprep.subr.bf16.mxu0 0
    %119 = vmatpush1.bf16.msra.mxu0 0
    %120 = vmatprep.subr.bf16.mxu0 0
    %121 = vmatpush1.bf16.msra.mxu0 0
    %122 = vmatprep.subr.bf16.mxu0 0
    %123 = vmatpush1.bf16.msra.mxu0 0
    %124 = vmatprep.subr.bf16.mxu0 0
    %125 = vmatpush1.bf16.msra.mxu0 0
    %126 = vmatprep.mubr.bf16.mxu0 0
    %127 = vmatmul.mubr.bf16.gmra.mrb[0].mxu0 %v92
    %v128 = vpop.f32.mrb[0].mxu0
    %v129 = vadd.f32 0.0, %v128
    %v130 = vpop.f32.mrb[0].mxu0
    %v131 = vpop.f32.mrb[0].mxu0
    %v132 = vpop.f32.mrb[0].mxu0
    %133 = vdwg.mxu0
    %v134 = vpack.c.bf16 %v129, %v129
    %v135 = vld [vmem:[%s2] sm:$0x1]
    %v137 = vpack.i.b16 %v135, %v135
    %v139 = vlaneseq
    %v140 = vshrl.u32 %v139, 7
    %v141 = vsub.s32 0, %v140
    %v142 = vrot.slane %v137, %v141
    %v143 = vadd.bf16 %v134, %v142
    %v144 = vtanh.bf16.pop %v143
    %v145 = vld [vmem:[#allocation6] sm:$0xf]
    %v146 = vld [vmem:[#allocation6 + $0x4] sm:$0xf]
    %v147 = vld [vmem:[#allocation6 + $0x8] sm:$0xf]
    %v148 = vld [vmem:[#allocation6 + $0xc] sm:$0xf]
    %v149 = vld [vmem:[#allocation6 + $0x10] sm:$0xf]
    %v150 = vld [vmem:[#allocation6 + $0x14] sm:$0xf]
    %v151 = vld [vmem:[#allocation6 + $0x18] sm:$0xf]
    %v152 = vld [vmem:[#allocation6 + $0x1c] sm:$0xf]
    %v161 = vunpack.c.l.b16 %v145
    %v162 = vunpack.c.l.b16 %v146
    %v163 = vunpack.c.l.b16 %v147
    %v164 = vunpack.c.l.b16 %v148
    %v165 = vunpack.c.l.b16 %v149
    %v166 = vunpack.c.l.b16 %v150
    %v167 = vunpack.c.l.b16 %v151
    %v168 = vunpack.c.l.b16 %v152
    %v169 = vpack.c.b16 %v162, %v161
    %v170 = vpack.c.b16 %v164, %v163
    %v171 = vpack.c.b16 %v166, %v165
    %v172 = vpack.c.b16 %v168, %v167
    %vm177 = vcmask 523264
    %v179 = vsel %vm177, %v144, 0
    %181 = vmatprep.subr.bf16.mxu0 0
    %182 = vmatpush1.bf16.msra.mxu0 %v169
    %183 = vmatprep.subr.bf16.mxu0 0
    %184 = vmatpush1.bf16.msra.mxu0 %v170
    %185 = vmatprep.subr.bf16.mxu0 0
    %186 = vmatpush1.bf16.msra.mxu0 %v171
    %187 = vmatprep.subr.bf16.mxu0 0
    %188 = vmatpush1.bf16.msra.mxu0 %v172
    %189 = vmatprep.subr.bf16.mxu0 0
    %190 = vmatpush1.bf16.msra.mxu0 0
    %191 = vmatprep.subr.bf16.mxu0 0
    %192 = vmatpush1.bf16.msra.mxu0 0
    %193 = vmatprep.subr.bf16.mxu0 0
    %194 = vmatpush1.bf16.msra.mxu0 0
    %195 = vmatprep.subr.bf16.mxu0 0
    %196 = vmatpush1.bf16.msra.mxu0 0
    %197 = vmatprep.subr.bf16.mxu0 0
    %198 = vmatpush1.bf16.msra.mxu0 0
    %199 = vmatprep.subr.bf16.mxu0 0
    %200 = vmatpush1.bf16.msra.mxu0 0
    %201 = vmatprep.subr.bf16.mxu0 0
    %202 = vmatpush1.bf16.msra.mxu0 0
    %203 = vmatprep.subr.bf16.mxu0 0
    %204 = vmatpush1.bf16.msra.mxu0 0
    %205 = vmatprep.subr.bf16.mxu0 0
    %206 = vmatpush1.bf16.msra.mxu0 0
    %207 = vmatprep.subr.bf16.mxu0 0
    %208 = vmatpush1.bf16.msra.mxu0 0
    %209 = vmatprep.subr.bf16.mxu0 0
    %210 = vmatpush1.bf16.msra.mxu0 0
    %211 = vmatprep.subr.bf16.mxu0 0
    %212 = vmatpush1.bf16.msra.mxu0 0
    %213 = vmatprep.mubr.bf16.mxu0 0
    %214 = vmatmul.mubr.bf16.gmra.mrb[0].mxu0 %v179
    %v215 = vpop.f32.mrb[0].mxu0
    %v216 = vadd.f32 0.0, %v215
    %v217 = vpop.f32.mrb[0].mxu0
    %v218 = vpop.f32.mrb[0].mxu0
    %v219 = vpop.f32.mrb[0].mxu0
    %220 = vdwg.mxu0
    %v221 = vpack.c.bf16 %v216, %v216
    %v222 = vld [vmem:[%s4] sm:$0x1]
    %v224 = vpack.i.b16 %v222, %v222
    %v226 = vlaneseq
    %v227 = vshrl.u32 %v226, 7
    %v228 = vsub.s32 0, %v227
    %v229 = vrot.slane %v224, %v228
    %v230 = vadd.bf16 %v221, %v229
    %v231 = vtanh.bf16.pop %v230
    %v232 = vld [vmem:[#allocation7] sm:$0xf]
    %v233 = vld [vmem:[#allocation7 + $0x4] sm:$0xf]
    %v234 = vld [vmem:[#allocation7 + $0x8] sm:$0xf]
    %v235 = vld [vmem:[#allocation7 + $0xc] sm:$0xf]
    %v236 = vld [vmem:[#allocation7 + $0x10] sm:$0xf]
    %v237 = vld [vmem:[#allocation7 + $0x14] sm:$0xf]
    %v238 = vld [vmem:[#allocation7 + $0x18] sm:$0xf]
    %v239 = vld [vmem:[#allocation7 + $0x1c] sm:$0xf]
    %v240 = vld [vmem:[%s6] sm:$0x1]
    %v242 = vlaneseq
    %v243 = vshrl.u32 %v242, 7
    %v244 = vsub.s32 0, %v243
    %v245 = vrot.slane %v240, %v244
    %v255 = vunpack.c.l.b16 %v232
    %v256 = vunpack.c.l.b16 %v233
    %v257 = vunpack.c.l.b16 %v234
    %v258 = vunpack.c.l.b16 %v235
    %v259 = vunpack.c.l.b16 %v236
    %v260 = vunpack.c.l.b16 %v237
    %v261 = vunpack.c.l.b16 %v238
    %v262 = vunpack.c.l.b16 %v239
    %v263 = vpack.c.b16 %v256, %v255
    %v264 = vpack.c.b16 %v258, %v257
    %v265 = vpack.c.b16 %v260, %v259
    %v266 = vpack.c.b16 %v262, %v261
    %v272 = vsel %vm177, %v231, 0
    %274 = vmatprep.subr.bf16.mxu0 0
    %275 = vmatpush1.bf16.msra.mxu0 %v263
    %276 = vmatprep.subr.bf16.mxu0 0
    %277 = vmatpush1.bf16.msra.mxu0 %v264
    %278 = vmatprep.subr.bf16.mxu0 0
    %279 = vmatpush1.bf16.msra.mxu0 %v265
    %280 = vmatprep.subr.bf16.mxu0 0
    %281 = vmatpush1.bf16.msra.mxu0 %v266
    %282 = vmatprep.subr.bf16.mxu0 0
    %283 = vmatpush1.bf16.msra.mxu0 0
    %284 = vmatprep.subr.bf16.mxu0 0
    %285 = vmatpush1.bf16.msra.mxu0 0
    %286 = vmatprep.subr.bf16.mxu0 0
    %287 = vmatpush1.bf16.msra.mxu0 0
    %288 = vmatprep.subr.bf16.mxu0 0
    %289 = vmatpush1.bf16.msra.mxu0 0
    %290 = vmatprep.subr.bf16.mxu0 0
    %291 = vmatpush1.bf16.msra.mxu0 0
    %292 = vmatprep.subr.bf16.mxu0 0
    %293 = vmatpush1.bf16.msra.mxu0 0
    %294 = vmatprep.subr.bf16.mxu0 0
    %295 = vmatpush1.bf16.msra.mxu0 0
    %296 = vmatprep.subr.bf16.mxu0 0
    %297 = vmatpush1.bf16.msra.mxu0 0
    %298 = vmatprep.subr.bf16.mxu0 0
    %299 = vmatpush1.bf16.msra.mxu0 0
    %300 = vmatprep.subr.bf16.mxu0 0
    %301 = vmatpush1.bf16.msra.mxu0 0
    %302 = vmatprep.subr.bf16.mxu0 0
    %303 = vmatpush1.bf16.msra.mxu0 0
    %304 = vmatprep.subr.bf16.mxu0 0
    %305 = vmatpush1.bf16.msra.mxu0 0
    %306 = vmatprep.mubr.bf16.mxu0 0
    %307 = vmatmul.mubr.bf16.gmra.mrb[0].mxu0 %v272
    %v308 = vpop.f32.mrb[0].mxu0
    %v309 = vadd.f32 %v245, %v308
    %v310 = vpop.f32.mrb[0].mxu0
    %v311 = vpop.f32.mrb[0].mxu0
    %v312 = vpop.f32.mrb[0].mxu0
    %313 = vdwg.mxu0
    %v314 = vmax.f32 %v309, -13.815511
    %v315 = vmul.f32 %v314, 1.442695
    %v316 = vpow.pop %v315
    %v317 = vlaneseq
    %v318 = vand.u32 %v317, 127
    %vm319 = vcmp.ge.s32.totalorder %v318, 36
    %vm320 = vcmp.lt.s32.totalorder %v318, 68
    %vm321 = vmand %vm319, %vm320
    %v322 = vsel %vm321, 1, 0
    %vm323 = vcmp.eq.s32.totalorder %v322, 1
    %v324 = vsel %vm323, %v316, %v309
    %v325 = vpack.c.bf16 %v324, %v324
    %326 = vst [vmem:[%s7] sm:$0xf] %v325
    // Predicated region
    $region46: #{gmm_mlp_forward.1} parent=1 // pred_check
      _
    $region47: #{gmm_mlp_forward.1} parent=1 // pred_check_branch
      %328 = sbr.rel (0) target = $region49
    $region48: #{gmm_mlp_forward.1} parent=1 // pred_region
      _
    $region49: #{gmm_mlp_forward.1} parent=1 // pred_fallthru
      _
    // Predicated region
    $region50: #{gmm_mlp_forward.1} parent=1 // pred_check
      _
    $region51: #{gmm_mlp_forward.1} parent=1 // pred_check_branch
      %330 = sbr.rel (0) target = $region53
    $region52: #{gmm_mlp_forward.1} parent=1 // pred_region
      _
    $region53: #{gmm_mlp_forward.1} parent=1 // pred_fallthru
      _
    %331 = vsyncpa [#allocation3], 1
    %332 = vsyncpa [#allocation5], 1
    %333 = vsyncpa [#allocation8], 1

</llo_original>
